<compile_context>
chip_gen: v5e
topology: v5e:2x2
jax: 0.10.0
libtpu: 0.0.40
codegen_flags: <defaults>
</compile_context>

<pallas_src>
import numpy as np
import jax
import jax.numpy as jnp
from jax.experimental import pallas as pl
from jax.experimental.pallas import tpu as pltpu


def _round_up(x, m):
    return (x + m - 1) // m * m


def _bilinear_kernel(la_ref, ra_ref, u2_ref, t_ref, sel_ref, out_ref):
    # S[b, o*Ra+r] = sum_l left_aug[b,l] * U_aug[o,l,r]          (single 2-D MXU matmul)
    s = jnp.dot(la_ref[...], u2_ref[...], preferred_element_type=jnp.float32)
    # RT[b, o*Ra+r] = right_aug[b, r]  (replication via 0/1 matmul -> no lane reshuffles)
    rt = jnp.dot(ra_ref[...], t_ref[...], preferred_element_type=jnp.float32)
    # P[b, o*Ra+r] = S * right  (lane-dense VPU elementwise)
    p = s * rt
    # out[b, o] = sum_r P[b, o*Ra+r]   (reduction done on the MXU via 0/1 selection matrix)
    out = jnp.dot(p, sel_ref[...], preferred_element_type=jnp.float32)
    out_ref[...] = out.astype(out_ref.dtype)


def bilinear_forward(input_left, input_right, U, W_l, W_r, bias=None, *, batch_tile=512):
    """Wrapper: flatten batch, build augmented/restructured weights, call the Pallas kernel."""
    left_size = input_left.shape
    right_size = input_right.shape
    assert left_size[:-1] == right_size[:-1], "batch dims of left/right mismatch"

    O, L, R = U.shape
    assert W_l.shape == (O, L), "W_l shape mismatch"
    # The original PyTorch module creates W_r with shape (out, left_features) and applies it
    # to the right input -> this silently requires left_features == right_features.
    assert W_r.shape == (O, L) and L == R, \
        "W_r is (out_features, left_features) applied to right input: requires L == R"

    dtype = input_left.dtype
    if bias is None:
        bias = jnp.zeros((O,), dtype)

    batch = int(np.prod(left_size[:-1])) if len(left_size) > 1 else 1
    left2 = input_left.reshape(batch, L)
    right2 = input_right.reshape(batch, R)

    # --- augmented inputs: extra constant-1 column folds W_l / W_r / bias into U ---
    ones = jnp.ones((batch, 1), dtype)
    left_a = jnp.concatenate([left2, ones], axis=-1)     # (batch, L+1)
    right_a = jnp.concatenate([right2, ones], axis=-1)   # (batch, R+1)
    La, Ra = L + 1, R + 1

    # --- augmented U ---
    #   U_aug[o, :L, :R] = U ; U_aug[o, :L, R] = W_l[o] ; U_aug[o, L, :R] = W_r[o] ; U_aug[o, L, R] = bias[o]
    U_aug = jnp.zeros((O, La, Ra), jnp.float32)
    U_aug = U_aug.at[:, :L, :R].set(U.astype(jnp.float32))
    U_aug = U_aug.at[:, :L, R].set(W_l.astype(jnp.float32))
    U_aug = U_aug.at[:, L, :R].set(W_r.astype(jnp.float32))
    U_aug = U_aug.at[:, L, R].set(bias.astype(jnp.float32))

    OC = O * Ra                                           # intermediate lane width
    O_pad = _round_up(O, 128)                             # lane-dense output width

    # U2[l, o*Ra + r] = U_aug[o, l, r]
    U2 = jnp.transpose(U_aug, (1, 0, 2)).reshape(La, OC).astype(dtype)
    # T[r, o*Ra + r'] = (r == r')  -> right replicated per output o via MXU
    T = jnp.tile(jnp.eye(Ra, dtype=dtype), (1, O))        # (Ra, OC)
    # Sel[o*Ra + r, o'] = (o == o'), zero-padded columns up to O_pad (kept f32: exact 0/1)
    Sel = jnp.kron(jnp.eye(O, dtype=jnp.float32), jnp.ones((Ra, 1), jnp.float32))  # (OC, O)
    Sel = jnp.pad(Sel, ((0, 0), (0, O_pad - O)))

    # --- pad batch to a clean sublane / batch-tile multiple ---
    if batch >= batch_tile:
        TB = batch_tile
    else:
        TB = _round_up(batch, 8)
    B_pad = _round_up(batch, TB)
    if B_pad != batch:
        left_a = jnp.pad(left_a, ((0, B_pad - batch), (0, 0)))
        right_a = jnp.pad(right_a, ((0, B_pad - batch), (0, 0)))

    grid = (B_pad // TB,)
    out = pl.pallas_call(
        _bilinear_kernel,
        out_shape=jax.ShapeDtypeStruct((B_pad, O_pad), dtype),
        grid_spec=pltpu.PrefetchScalarGridSpec(
            num_scalar_prefetch=0,
            grid=grid,
            in_specs=[
                pl.BlockSpec((TB, La), lambda i: (i, 0)),       # left_aug: tiled over batch
                pl.BlockSpec((TB, Ra), lambda i: (i, 0)),       # right_aug: tiled over batch
                pl.BlockSpec((La, OC), lambda i: (0, 0)),       # U2: VMEM-resident
                pl.BlockSpec((Ra, OC), lambda i: (0, 0)),       # T: VMEM-resident
                pl.BlockSpec((OC, O_pad), lambda i: (0, 0)),    # Sel: VMEM-resident
            ],
            out_specs=pl.BlockSpec((TB, O_pad), lambda i: (i, 0)),
        ),
        compiler_params=pltpu.CompilerParams(
            dimension_semantics=("parallel",)),                 # batch axis shards across TCs (v7x)
    )(left_a, right_a, U2, T, Sel)

    out = out[:batch, :O]
    return out.reshape(left_size[:-1] + (O,))


def _xavier_uniform(key, shape):
    # PyTorch xavier_uniform_: fan_in = shape[1]*prod(shape[2:]), fan_out = shape[0]*prod(shape[2:])
    receptive = int(np.prod(shape[2:])) if len(shape) > 2 else 1
    fan_in = shape[1] * receptive
    fan_out = shape[0] * receptive
    bound = float(np.sqrt(6.0 / (fan_in + fan_out)))
    return jax.random.uniform(key, shape, jnp.float32, minval=-bound, maxval=bound)


if __name__ == "__main__":
    left_features = 32
    right_features = 32
    out_features = 16
    batch_dims = (2, 4)

    key = jax.random.PRNGKey(0)
    k_u, k_wl, k_wr, k_l, k_r = jax.random.split(key, 5)

    U = _xavier_uniform(k_u, (out_features, left_features, right_features))
    W_l = _xavier_uniform(k_wl, (out_features, left_features))
    W_r = _xavier_uniform(k_wr, (out_features, left_features))
    bias = jnp.zeros((out_features,), jnp.float32)

    input_left = jax.random.normal(k_l, batch_dims + (left_features,), jnp.float32)
    input_right = jax.random.normal(k_r, batch_dims + (right_features,), jnp.float32)

    out = bilinear_forward(input_left, input_right, U, W_l, W_r, bias)
    out = jax.block_until_ready(out)

    # Pure-JAX reference check
    lf = input_left.reshape(-1, left_features)
    rf = input_right.reshape(-1, right_features)
    ref = (jnp.einsum('bi,oij,bj->bo', lf, U, rf)
           + lf @ W_l.T + rf @ W_r.T + bias)
    ref = ref.reshape(batch_dims + (out_features,))
    assert out.shape == batch_dims + (out_features,)
    np.testing.assert_allclose(np.asarray(out), np.asarray(ref), rtol=1e-4, atol=1e-4)

    print("KERNEL_OK")
</pallas_src>

<mosaic_0001>
module attributes {stable_mosaic.version = 11 : i64} {
  func.func @_bilinear_kernel(%arg0: i32, %arg1: memref<8x33xf32, #tpu.memory_space<vmem>>, %arg2: memref<8x33xf32, #tpu.memory_space<vmem>>, %arg3: memref<33x528xf32, #tpu.memory_space<vmem>>, %arg4: memref<33x528xf32, #tpu.memory_space<vmem>>, %arg5: memref<528x128xf32, #tpu.memory_space<vmem>>, %arg6: memref<8x128xf32, #tpu.memory_space<vmem>>) attributes {dimension_semantics = [#tpu.dimension_semantics<parallel>], iteration_bounds = array<i64: 1>, scalar_prefetch = 0 : i64, scratch_operands = 0 : i64, tpu.core_type = #tpu.core_type<tc>, window_params = [{transform_indices = @transform_0, window_bounds = array<i64: 8, 33>}, {transform_indices = @transform_1, window_bounds = array<i64: 8, 33>}, {pipeline_mode = #tpu.pipeline_mode<synchronous>, transform_indices = @transform_2, window_bounds = array<i64: 33, 528>}, {pipeline_mode = #tpu.pipeline_mode<synchronous>, transform_indices = @transform_3, window_bounds = array<i64: 33, 528>}, {pipeline_mode = #tpu.pipeline_mode<synchronous>, transform_indices = @transform_4, window_bounds = array<i64: 528, 128>}, {transform_indices = @transform_5, window_bounds = array<i64: 8, 128>}]} {
    %c0 = arith.constant 0 : index
    %c0_0 = arith.constant 0 : index
    %0 = vector.load %arg1[%c0, %c0_0] : memref<8x33xf32, #tpu.memory_space<vmem>>, vector<8x33xf32>
    %c0_1 = arith.constant 0 : index
    %c0_2 = arith.constant 0 : index
    %1 = vector.load %arg3[%c0_1, %c0_2] : memref<33x528xf32, #tpu.memory_space<vmem>>, vector<33x528xf32>
    %cst = arith.constant dense<0.000000e+00> : vector<8x528xf32>
    %2 = tpu.matmul %0, %1, %cst {dimension_numbers = #tpu.dot_dimension_numbers<[1], [0], [0], [1], [0, 0, 1, 1], [], []>} : vector<8x33xf32>, vector<33x528xf32>, vector<8x528xf32> -> vector<8x528xf32>
    %c0_3 = arith.constant 0 : index
    %c0_4 = arith.constant 0 : index
    %3 = vector.load %arg2[%c0_3, %c0_4] : memref<8x33xf32, #tpu.memory_space<vmem>>, vector<8x33xf32>
    %c0_5 = arith.constant 0 : index
    %c0_6 = arith.constant 0 : index
    %4 = vector.load %arg4[%c0_5, %c0_6] : memref<33x528xf32, #tpu.memory_space<vmem>>, vector<33x528xf32>
    %cst_7 = arith.constant dense<0.000000e+00> : vector<8x528xf32>
    %5 = tpu.matmul %3, %4, %cst_7 {dimension_numbers = #tpu.dot_dimension_numbers<[1], [0], [0], [1], [0, 0, 1, 1], [], []>} : vector<8x33xf32>, vector<33x528xf32>, vector<8x528xf32> -> vector<8x528xf32>
    %6 = arith.mulf %2, %5 : vector<8x528xf32>
    %c0_8 = arith.constant 0 : index
    %c0_9 = arith.constant 0 : index
    %7 = vector.load %arg5[%c0_8, %c0_9] : memref<528x128xf32, #tpu.memory_space<vmem>>, vector<528x128xf32>
    %cst_10 = arith.constant dense<0.000000e+00> : vector<8x128xf32>
    %8 = tpu.matmul %6, %7, %cst_10 {dimension_numbers = #tpu.dot_dimension_numbers<[1], [0], [0], [1], [0, 0, 1, 1], [], []>} : vector<8x528xf32>, vector<528x128xf32>, vector<8x128xf32> -> vector<8x128xf32>
    %c0_11 = arith.constant 0 : index
    %c0_12 = arith.constant 0 : index
    %9 = vector.load %arg6[%c0_11, %c0_12] : memref<8x128xf32, #tpu.memory_space<vmem>>, vector<8x128xf32>
    tpu.vector_store %arg6[%c0_11, %c0_12], %8 {strides = array<i32>} : memref<8x128xf32, #tpu.memory_space<vmem>>, vector<8x128xf32>,
    return
  }
  func.func @transform_0(%arg0: i32) -> (i32, i32) {
    %c0_i32 = arith.constant 0 : i32
    %c0_i32_0 = arith.constant 0 : i32
    return %arg0, %c0_i32 : i32, i32
  }
  func.func @transform_1(%arg0: i32) -> (i32, i32) {
    %c0_i32 = arith.constant 0 : i32
    %c0_i32_0 = arith.constant 0 : i32
    return %arg0, %c0_i32 : i32, i32
  }
  func.func @transform_2(%arg0: i32) -> (i32, i32) {
    %c0_i32 = arith.constant 0 : i32
    %c0_i32_0 = arith.constant 0 : i32
    %c0_i32_1 = arith.constant 0 : i32
    return %c0_i32, %c0_i32_0 : i32, i32
  }
  func.func @transform_3(%arg0: i32) -> (i32, i32) {
    %c0_i32 = arith.constant 0 : i32
    %c0_i32_0 = arith.constant 0 : i32
    %c0_i32_1 = arith.constant 0 : i32
    return %c0_i32, %c0_i32_0 : i32, i32
  }
  func.func @transform_4(%arg0: i32) -> (i32, i32) {
    %c0_i32 = arith.constant 0 : i32
    %c0_i32_0 = arith.constant 0 : i32
    %c0_i32_1 = arith.constant 0 : i32
    return %c0_i32, %c0_i32_0 : i32, i32
  }
  func.func @transform_5(%arg0: i32) -> (i32, i32) {
    %c0_i32 = arith.constant 0 : i32
    %c0_i32_0 = arith.constant 0 : i32
    return %arg0, %c0_i32 : i32, i32
  }
}

</mosaic_0001>

<llo_original>
// kernel: tpu_custom_call.1
$region0: #{tpu_custom_call.1}
  #allocation0 [shape = 'u32[]', space=smem, size = 0x4, offset = 0x4, fixed_abs, tag = 'smem constant byte address 0x4 - core index']
  #allocation1 [shape = 'u32[72,128]{1,0:T(1,128)}', space=vmem, size = 0x9000, scoped, tag = 'internal scratch']
  %s0 = inlined_call_operand.hbm [shape: f32[8,33], index: 0, kind: input, shape index: {}]
  %s1 = inlined_call_operand.hbm [shape: f32[8,33], index: 1, kind: input, shape index: {}]
  %s2 = inlined_call_operand.hbm [shape: f32[33,528], index: 2, kind: input, shape index: {}]
  %s3 = inlined_call_operand.hbm [shape: f32[33,528], index: 3, kind: input, shape index: {}]
  %s4 = inlined_call_operand.hbm [shape: f32[528,128], index: 4, kind: input, shape index: {}]
  %s5 = inlined_call_operand.hbm [shape: f32[8,128], index: 5, kind: output, shape index: {}]
  %s6 = sld [smem:[#allocation0]]
  $region50: #{tpu_custom_call.1} parent=0
    _
  %s8 = ssub.s32 1, %s6
  %s9 = scalar_select 0, %s8, %s6
  $region1: #{tpu_custom_call.1} parent=0
    #allocation2 [shape = 'u8[4096]{0}', space=vmem, size = 0x1000, scoped, tag = 'input window, operand 0, single buffered']
    #allocation3 [shape = 's32[1]{0}', space=sflag, size = 0x4, scoped, tag = 'scoped memory for tpu_custom_call.1']
    #allocation4 [shape = 's32[1]{0}', space=sflag, size = 0x4, scoped, tag = 'scoped memory for tpu_custom_call.1']
    #allocation5 [shape = 'u8[4096]{0}', space=vmem, size = 0x1000, scoped, tag = 'input window, operand 1, single buffered']
    #allocation6 [shape = 's32[1]{0}', space=sflag, size = 0x4, scoped, tag = 'scoped memory for tpu_custom_call.1']
    #allocation7 [shape = 'u8[102400]{0}', space=vmem, size = 0x19000, scoped, tag = 'input window, operand 2, single buffered']
    #allocation8 [shape = 'u8[102400]{0}', space=vmem, size = 0x19000, scoped, tag = 'input window, operand 3, single buffered']
    #allocation9 [shape = 's32[1]{0}', space=sflag, size = 0x4, scoped, tag = 'scoped memory for tpu_custom_call.1']
    #allocation10 [shape = 'u8[270336]{0}', space=vmem, size = 0x42000, scoped, tag = 'input window, operand 4, single buffered']
    #allocation11 [shape = 'u8[4096]{0}', space=vmem, size = 0x1000, scoped, tag = 'output window, operand 0, single buffered']
    %10 = vsyncpa [#allocation3], 0
    %11 = vsyncpa [#allocation6], 0
    %12 = vsyncpa [#allocation9], 0
    %13 = vsyncpa [#allocation4], 0
    // Predicated region
    $region2: #{tpu_custom_call.1} parent=1 // pred_check
      _
    $region3: #{tpu_custom_call.1} parent=1 // pred_check_branch
      %15 = sbr.rel (0) target = $region5
    $region4: #{tpu_custom_call.1} parent=1 // pred_region
      %17 = vsyncadd [#allocation3], 0
      %s19 = sshll.u32 %s0, 4
      %s20 = int_to_ptr.hbm [resolvable:$true] %s19
      %s21 = sshll.u32 [#allocation2], 4
      %s22 = int_to_ptr.vmem [resolvable:$true] %s21
      %24 = dma.hbm_to_vmem [thread:$0]  %s20, 128, %s22, [#allocation3]
    $region5: #{tpu_custom_call.1} parent=1 // pred_fallthru
      _
    // Predicated region
    $region6: #{tpu_custom_call.1} parent=1 // pred_check
      _
    $region7: #{tpu_custom_call.1} parent=1 // pred_check_branch
      %26 = sbr.rel (0) target = $region9
    $region8: #{tpu_custom_call.1} parent=1 // pred_region
      %28 = vsyncadd [#allocation6], 0
      %s30 = sshll.u32 %s1, 4
      %s31 = int_to_ptr.hbm [resolvable:$true] %s30
      %s32 = sshll.u32 [#allocation5], 4
      %s33 = int_to_ptr.vmem [resolvable:$true] %s32
      %35 = dma.hbm_to_vmem [thread:$0]  %s31, 128, %s33, [#allocation6]
    $region9: #{tpu_custom_call.1} parent=1 // pred_fallthru
      _
    // Predicated region
    $region10: #{tpu_custom_call.1} parent=1 // pred_check
      _
    $region11: #{tpu_custom_call.1} parent=1 // pred_check_branch
      %37 = sbr.rel (0) target = $region13
    $region12: #{tpu_custom_call.1} parent=1 // pred_region
      %39 = vsyncadd [#allocation6], 0
      %s40 = sshll.u32 %s2, 4
      %s41 = int_to_ptr.hbm [resolvable:$true] %s40
      %s42 = sshll.u32 [#allocation7], 4
      %s43 = int_to_ptr.vmem [resolvable:$true] %s42
      %48 = dma.hbm_to_vmem [thread:$0]  %s41, 3200, %s43, [#allocation6], 640, 640, 40
    $region13: #{tpu_custom_call.1} parent=1 // pred_fallthru
      _
    // Predicated region
    $region14: #{tpu_custom_call.1} parent=1 // pred_check
      _
    $region15: #{tpu_custom_call.1} parent=1 // pred_check_branch
      %50 = sbr.rel (0) target = $region17
    $region16: #{tpu_custom_call.1} parent=1 // pred_region
      %52 = vsyncadd [#allocation9], 0
      %s53 = sshll.u32 %s3, 4
      %s54 = int_to_ptr.hbm [resolvable:$true] %s53
      %s55 = sshll.u32 [#allocation8], 4
      %s56 = int_to_ptr.vmem [resolvable:$true] %s55
      %61 = dma.hbm_to_vmem [thread:$0]  %s54, 3200, %s56, [#allocation9], 640, 640, 40
    $region17: #{tpu_custom_call.1} parent=1 // pred_fallthru
      _
    // Predicated region
    $region18: #{tpu_custom_call.1} parent=1 // pred_check
      _
    $region19: #{tpu_custom_call.1} parent=1 // pred_check_branch
      %63 = sbr.rel (0) target = $region21
    $region20: #{tpu_custom_call.1} parent=1 // pred_region
      %65 = vsyncadd [#allocation9], 0
      %s66 = sshll.u32 %s4, 4
      %s67 = int_to_ptr.hbm [resolvable:$true] %s66
      %s68 = sshll.u32 [#allocation10], 4
      %s69 = int_to_ptr.vmem [resolvable:$true] %s68
      %74 = dma.hbm_to_vmem [thread:$0]  %s67, 8448, %s69, [#allocation9], 128, 128, 8
    $region21: #{tpu_custom_call.1} parent=1 // pred_fallthru
      _
    // Predicated region
    $region22: #{tpu_custom_call.1} parent=1 // pred_check
      _
    $region23: #{tpu_custom_call.1} parent=1 // pred_check_branch
      %76 = sbr.rel (0) target = $region25
    $region24: #{tpu_custom_call.1} parent=1 // pred_region
      %78 = dma.done [#allocation3], 128
    $region25: #{tpu_custom_call.1} parent=1 // pred_fallthru
      _
    // Predicated region
    $region26: #{tpu_custom_call.1} parent=1 // pred_check
      _
    $region27: #{tpu_custom_call.1} parent=1 // pred_check_branch
      %80 = sbr.rel (0) target = $region29
    $region28: #{tpu_custom_call.1} parent=1 // pred_region
      %82 = dma.done [#allocation6], 128
    $region29: #{tpu_custom_call.1} parent=1 // pred_fallthru
      _
    // Predicated region
    $region30: #{tpu_custom_call.1} parent=1 // pred_check
      _
    $region31: #{tpu_custom_call.1} parent=1 // pred_check_branch
      %84 = sbr.rel (0) target = $region33
    $region32: #{tpu_custom_call.1} parent=1 // pred_region
      %86 = dma.done [#allocation6], 3200
    $region33: #{tpu_custom_call.1} parent=1 // pred_fallthru
      _
    // Predicated region
    $region34: #{tpu_custom_call.1} parent=1 // pred_check
      _
    $region35: #{tpu_custom_call.1} parent=1 // pred_check_branch
      %88 = sbr.rel (0) target = $region37
    $region36: #{tpu_custom_call.1} parent=1 // pred_region
      %90 = dma.done [#allocation9], 3200
    $region37: #{tpu_custom_call.1} parent=1 // pred_fallthru
      _
    // Predicated region
    $region38: #{tpu_custom_call.1} parent=1 // pred_check
      _
    $region39: #{tpu_custom_call.1} parent=1 // pred_check_branch
      %92 = sbr.rel (0) target = $region41
    $region40: #{tpu_custom_call.1} parent=1 // pred_region
      %94 = dma.done [#allocation9], 8448
    $region41: #{tpu_custom_call.1} parent=1 // pred_fallthru
      _
    %v95 = vld [vmem:[#allocation2] sm:$0xff]
    %v96 = vld [vmem:[#allocation7] sm:$0xff]
    %v97 = vld [vmem:[#allocation7 + $0x8] sm:$0xff]
    %v98 = vld [vmem:[#allocation7 + $0x10] sm:$0xff]
    %v99 = vld [vmem:[#allocation7 + $0x18] sm:$0xff]
    %v100 = vld [vmem:[#allocation7 + $0x20] sm:$0xff]
    %v101 = vld [vmem:[#allocation7 + $0x28] sm:$0xff]
    %v102 = vld [vmem:[#allocation7 + $0x30] sm:$0xff]
    %v103 = vld [vmem:[#allocation7 + $0x38] sm:$0xff]
    %v104 = vld [vmem:[#allocation7 + $0x40] sm:$0xff]
    %v105 = vld [vmem:[#allocation7 + $0x48] sm:$0xff]
    %v106 = vld [vmem:[#allocation7 + $0x50] sm:$0xff]
    %v107 = vld [vmem:[#allocation7 + $0x58] sm:$0xff]
    %v108 = vld [vmem:[#allocation7 + $0x60] sm:$0xff]
    %v109 = vld [vmem:[#allocation7 + $0x68] sm:$0xff]
    %v110 = vld [vmem:[#allocation7 + $0x70] sm:$0xff]
    %v111 = vld [vmem:[#allocation7 + $0x78] sm:$0xff]
    %v112 = vld [vmem:[#allocation7 + $0x80] sm:$0xff]
    %v113 = vld [vmem:[#allocation7 + $0x88] sm:$0xff]
    %v114 = vld [vmem:[#allocation7 + $0x90] sm:$0xff]
    %v115 = vld [vmem:[#allocation7 + $0x98] sm:$0xff]
    %v116 = vld [vmem:[#allocation7 + $0xa0] sm:$0x1]
    %v117 = vld [vmem:[#allocation7 + $0xa8] sm:$0x1]
    %v118 = vld [vmem:[#allocation7 + $0xb0] sm:$0x1]
    %v119 = vld [vmem:[#allocation7 + $0xb8] sm:$0x1]
    %v120 = vld [vmem:[#allocation7 + $0xc0] sm:$0x1]
    %vm121 = vcmask 269312
    %v123 = vsel %vm121, %v95, 0
    %vm125 = vcmask 1040384
    %v127 = vsel %vm125, %v116, 0
    %v130 = vsel %vm125, %v117, 0
    %v133 = vsel %vm125, %v118, 0
    %v136 = vsel %vm125, %v119, 0
    %v139 = vsel %vm125, %v120, 0
    %141 = vmatpush.msra.mxu0 0.0
    %142 = vmatpush.msra.mxu0 0.0
    %143 = vmatpush.msra.mxu0 0.0
    %144 = vmatpush.msra.mxu0 0.0
    %145 = vmatpush.msra.mxu0 0.0
    %146 = vmatpush.msra.mxu0 0.0
    %147 = vmatpush.msra.mxu0 0.0
    %148 = vmatpush.msra.mxu0 0.0
    %149 = vmatpush.msra.mxu0 0.0
    %150 = vmatpush.msra.mxu0 0.0
    %151 = vmatpush.msra.mxu0 0.0
    %152 = vmatpush.msra.mxu0 %v127
    %153 = vmatpush.msra.mxu0 %v111
    %154 = vmatpush.msra.mxu0 %v106
    %155 = vmatpush.msra.mxu0 %v101
    %156 = vmatpush.msra.mxu0 %v96
    %157 = vmatmul.f32.gmra.mxu0 %v123
    %v158 = vpop.f32.mrf.mxu0
    %v159 = vadd.f32 0.0, %v158
    %160 = vdwg.mxu0
    %161 = vmatpush.msra.mxu0 0.0
    %162 = vmatpush.msra.mxu0 0.0
    %163 = vmatpush.msra.mxu0 0.0
    %164 = vmatpush.msra.mxu0 0.0
    %165 = vmatpush.msra.mxu0 0.0
    %166 = vmatpush.msra.mxu0 0.0
    %167 = vmatpush.msra.mxu0 0.0
    %168 = vmatpush.msra.mxu0 0.0
    %169 = vmatpush.msra.mxu0 0.0
    %170 = vmatpush.msra.mxu0 0.0
    %171 = vmatpush.msra.mxu0 0.0
    %172 = vmatpush.msra.mxu0 %v130
    %173 = vmatpush.msra.mxu0 %v112
    %174 = vmatpush.msra.mxu0 %v107
    %175 = vmatpush.msra.mxu0 %v102
    %176 = vmatpush.msra.mxu0 %v97
    %177 = vmatmul.f32.gmra.mxu0 %v123
    %v178 = vpop.f32.mrf.mxu0
    %v179 = vadd.f32 0.0, %v178
    %180 = vdwg.mxu0
    %181 = vmatpush.msra.mxu0 0.0
    %182 = vmatpush.msra.mxu0 0.0
    %183 = vmatpush.msra.mxu0 0.0
    %184 = vmatpush.msra.mxu0 0.0
    %185 = vmatpush.msra.mxu0 0.0
    %186 = vmatpush.msra.mxu0 0.0
    %187 = vmatpush.msra.mxu0 0.0
    %188 = vmatpush.msra.mxu0 0.0
    %189 = vmatpush.msra.mxu0 0.0
    %190 = vmatpush.msra.mxu0 0.0
    %191 = vmatpush.msra.mxu0 0.0
    %192 = vmatpush.msra.mxu0 %v133
    %193 = vmatpush.msra.mxu0 %v113
    %194 = vmatpush.msra.mxu0 %v108
    %195 = vmatpush.msra.mxu0 %v103
    %196 = vmatpush.msra.mxu0 %v98
    %197 = vmatmul.f32.gmra.mxu0 %v123
    %v198 = vpop.f32.mrf.mxu0
    %v199 = vadd.f32 0.0, %v198
    %200 = vdwg.mxu0
    %201 = vmatpush.msra.mxu0 0.0
    %202 = vmatpush.msra.mxu0 0.0
    %203 = vmatpush.msra.mxu0 0.0
    %204 = vmatpush.msra.mxu0 0.0
    %205 = vmatpush.msra.mxu0 0.0
    %206 = vmatpush.msra.mxu0 0.0
    %207 = vmatpush.msra.mxu0 0.0
    %208 = vmatpush.msra.mxu0 0.0
    %209 = vmatpush.msra.mxu0 0.0
    %210 = vmatpush.msra.mxu0 0.0
    %211 = vmatpush.msra.mxu0 0.0
    %212 = vmatpush.msra.mxu0 %v136
    %213 = vmatpush.msra.mxu0 %v114
    %214 = vmatpush.msra.mxu0 %v109
    %215 = vmatpush.msra.mxu0 %v104
    %216 = vmatpush.msra.mxu0 %v99
    %217 = vmatmul.f32.gmra.mxu0 %v123
    %v218 = vpop.f32.mrf.mxu0
    %v219 = vadd.f32 0.0, %v218
    %220 = vdwg.mxu0
    %221 = vmatpush.msra.mxu0 0.0
    %222 = vmatpush.msra.mxu0 0.0
    %223 = vmatpush.msra.mxu0 0.0
    %224 = vmatpush.msra.mxu0 0.0
    %225 = vmatpush.msra.mxu0 0.0
    %226 = vmatpush.msra.mxu0 0.0
    %227 = vmatpush.msra.mxu0 0.0
    %228 = vmatpush.msra.mxu0 0.0
    %229 = vmatpush.msra.mxu0 0.0
    %230 = vmatpush.msra.mxu0 0.0
    %231 = vmatpush.msra.mxu0 0.0
    %232 = vmatpush.msra.mxu0 %v139
    %233 = vmatpush.msra.mxu0 %v115
    %234 = vmatpush.msra.mxu0 %v110
    %235 = vmatpush.msra.mxu0 %v105
    %236 = vmatpush.msra.mxu0 %v100
    %237 = vmatmul.f32.gmra.mxu0 %v123
    %v238 = vpop.f32.mrf.mxu0
    %v239 = vadd.f32 0.0, %v238
    %240 = vdwg.mxu0
    %v241 = vld [vmem:[#allocation5] sm:$0xff]
    %v242 = vld [vmem:[#allocation8] sm:$0xff]
    %v243 = vld [vmem:[#allocation8 + $0x8] sm:$0xff]
    %v244 = vld [vmem:[#allocation8 + $0x10] sm:$0xff]
    %v245 = vld [vmem:[#allocation8 + $0x18] sm:$0xff]
    %v246 = vld [vmem:[#allocation8 + $0x20] sm:$0xff]
    %v247 = vld [vmem:[#allocation8 + $0x28] sm:$0xff]
    %v248 = vld [vmem:[#allocation8 + $0x30] sm:$0xff]
    %v249 = vld [vmem:[#allocation8 + $0x38] sm:$0xff]
    %v250 = vld [vmem:[#allocation8 + $0x40] sm:$0xff]
    %v251 = vld [vmem:[#allocation8 + $0x48] sm:$0xff]
    %v252 = vld [vmem:[#allocation8 + $0x50] sm:$0xff]
    %v253 = vld [vmem:[#allocation8 + $0x58] sm:$0xff]
    %v254 = vld [vmem:[#allocation8 + $0x60] sm:$0xff]
    %v255 = vld [vmem:[#allocation8 + $0x68] sm:$0xff]
    %v256 = vld [vmem:[#allocation8 + $0x70] sm:$0xff]
    %v257 = vld [vmem:[#allocation8 + $0x78] sm:$0xff]
    %v258 = vld [vmem:[#allocation8 + $0x80] sm:$0xff]
    %v259 = vld [vmem:[#allocation8 + $0x88] sm:$0xff]
    %v260 = vld [vmem:[#allocation8 + $0x90] sm:$0xff]
    %v261 = vld [vmem:[#allocation8 + $0x98] sm:$0xff]
    %v262 = vld [vmem:[#allocation8 + $0xa0] sm:$0x1]
    %v263 = vld [vmem:[#allocation8 + $0xa8] sm:$0x1]
    %v264 = vld [vmem:[#allocation8 + $0xb0] sm:$0x1]
    %v265 = vld [vmem:[#allocation8 + $0xb8] sm:$0x1]
    %v266 = vld [vmem:[#allocation8 + $0xc0] sm:$0x1]
    %v268 = vsel %vm121, %v241, 0
    %v271 = vsel %vm125, %v262, 0
    %v274 = vsel %vm125, %v263, 0
    %v277 = vsel %vm125, %v264, 0
    %v280 = vsel %vm125, %v265, 0
    %v283 = vsel %vm125, %v266, 0
    %285 = vmatpush.msra.mxu0 0.0
    %286 = vmatpush.msra.mxu0 0.0
    %287 = vmatpush.msra.mxu0 0.0
    %288 = vmatpush.msra.mxu0 0.0
    %289 = vmatpush.msra.mxu0 0.0
    %290 = vmatpush.msra.mxu0 0.0
    %291 = vmatpush.msra.mxu0 0.0
    %292 = vmatpush.msra.mxu0 0.0
    %293 = vmatpush.msra.mxu0 0.0
    %294 = vmatpush.msra.mxu0 0.0
    %295 = vmatpush.msra.mxu0 0.0
    %296 = vmatpush.msra.mxu0 %v271
    %297 = vmatpush.msra.mxu0 %v257
    %298 = vmatpush.msra.mxu0 %v252
    %299 = vmatpush.msra.mxu0 %v247
    %300 = vmatpush.msra.mxu0 %v242
    %301 = vmatmul.f32.gmra.mxu0 %v268
    %v302 = vpop.f32.mrf.mxu0
    %v303 = vadd.f32 0.0, %v302
    %304 = vdwg.mxu0
    %305 = vmatpush.msra.mxu0 0.0
    %306 = vmatpush.msra.mxu0 0.0
    %307 = vmatpush.msra.mxu0 0.0
    %308 = vmatpush.msra.mxu0 0.0
    %309 = vmatpush.msra.mxu0 0.0
    %310 = vmatpush.msra.mxu0 0.0
    %311 = vmatpush.msra.mxu0 0.0
    %312 = vmatpush.msra.mxu0 0.0
    %313 = vmatpush.msra.mxu0 0.0
    %314 = vmatpush.msra.mxu0 0.0
    %315 = vmatpush.msra.mxu0 0.0
    %316 = vmatpush.msra.mxu0 %v274
    %317 = vmatpush.msra.mxu0 %v258
    %318 = vmatpush.msra.mxu0 %v253
    %319 = vmatpush.msra.mxu0 %v248
    %320 = vmatpush.msra.mxu0 %v243
    %321 = vmatmul.f32.gmra.mxu0 %v268
    %v322 = vpop.f32.mrf.mxu0
    %v323 = vadd.f32 0.0, %v322
    %324 = vdwg.mxu0
    %325 = vmatpush.msra.mxu0 0.0
    %326 = vmatpush.msra.mxu0 0.0
    %327 = vmatpush.msra.mxu0 0.0
    %328 = vmatpush.msra.mxu0 0.0
    %329 = vmatpush.msra.mxu0 0.0
    %330 = vmatpush.msra.mxu0 0.0
    %331 = vmatpush.msra.mxu0 0.0
    %332 = vmatpush.msra.mxu0 0.0
    %333 = vmatpush.msra.mxu0 0.0
    %334 = vmatpush.msra.mxu0 0.0
    %335 = vmatpush.msra.mxu0 0.0
    %336 = vmatpush.msra.mxu0 %v277
    %337 = vmatpush.msra.mxu0 %v259
    %338 = vmatpush.msra.mxu0 %v254
    %339 = vmatpush.msra.mxu0 %v249
    %340 = vmatpush.msra.mxu0 %v244
    %341 = vmatmul.f32.gmra.mxu0 %v268
    %v342 = vpop.f32.mrf.mxu0
    %v343 = vadd.f32 0.0, %v342
    %344 = vdwg.mxu0
    %345 = vmatpush.msra.mxu0 0.0
    %346 = vmatpush.msra.mxu0 0.0
    %347 = vmatpush.msra.mxu0 0.0
    %348 = vmatpush.msra.mxu0 0.0
    %349 = vmatpush.msra.mxu0 0.0
    %350 = vmatpush.msra.mxu0 0.0
    %351 = vmatpush.msra.mxu0 0.0
    %352 = vmatpush.msra.mxu0 0.0
    %353 = vmatpush.msra.mxu0 0.0
    %354 = vmatpush.msra.mxu0 0.0
    %355 = vmatpush.msra.mxu0 0.0
    %356 = vmatpush.msra.mxu0 %v280
    %357 = vmatpush.msra.mxu0 %v260
    %358 = vmatpush.msra.mxu0 %v255
    %359 = vmatpush.msra.mxu0 %v250
    %360 = vmatpush.msra.mxu0 %v245
    %361 = vmatmul.f32.gmra.mxu0 %v268
    %v362 = vpop.f32.mrf.mxu0
    %v363 = vadd.f32 0.0, %v362
    %364 = vdwg.mxu0
    %365 = vmatpush.msra.mxu0 0.0
    %366 = vmatpush.msra.mxu0 0.0
    %367 = vmatpush.msra.mxu0 0.0
    %368 = vmatpush.msra.mxu0 0.0
    %369 = vmatpush.msra.mxu0 0.0
    %370 = vmatpush.msra.mxu0 0.0
    %371 = vmatpush.msra.mxu0 0.0
    %372 = vmatpush.msra.mxu0 0.0
    %373 = vmatpush.msra.mxu0 0.0
    %374 = vmatpush.msra.mxu0 0.0
    %375 = vmatpush.msra.mxu0 0.0
    %376 = vmatpush.msra.mxu0 %v283
    %377 = vmatpush.msra.mxu0 %v261
    %378 = vmatpush.msra.mxu0 %v256
    %379 = vmatpush.msra.mxu0 %v251
    %380 = vmatpush.msra.mxu0 %v246
    %381 = vmatmul.f32.gmra.mxu0 %v268
    %v382 = vpop.f32.mrf.mxu0
    %v383 = vadd.f32 0.0, %v382
    %384 = vdwg.mxu0
    %v385 = vmul.f32 %v159, %v303
    %v386 = vmul.f32 %v179, %v323
    %v387 = vmul.f32 %v199, %v343
    %v388 = vmul.f32 %v219, %v363
    %v389 = vmul.f32 %v239, %v383
    %v390 = vld [vmem:[#allocation10] sm:$0xff]
    %v391 = vld [vmem:[#allocation10 + $0x8] sm:$0xff]
    %v392 = vld [vmem:[#allocation10 + $0x10] sm:$0xff]
    %v393 = vld [vmem:[#allocation10 + $0x18] sm:$0xff]
    %v394 = vld [vmem:[#allocation10 + $0x20] sm:$0xff]
    %v395 = vld [vmem:[#allocation10 + $0x28] sm:$0xff]
    %v396 = vld [vmem:[#allocation10 + $0x30] sm:$0xff]
    %v397 = vld [vmem:[#allocation10 + $0x38] sm:$0xff]
    %v398 = vld [vmem:[#allocation10 + $0x40] sm:$0xff]
    %v399 = vld [vmem:[#allocation10 + $0x48] sm:$0xff]
    %v400 = vld [vmem:[#allocation10 + $0x50] sm:$0xff]
    %v401 = vld [vmem:[#allocation10 + $0x58] sm:$0xff]
    %v402 = vld [vmem:[#allocation10 + $0x60] sm:$0xff]
    %v403 = vld [vmem:[#allocation10 + $0x68] sm:$0xff]
    %v404 = vld [vmem:[#allocation10 + $0x70] sm:$0xff]
    %v405 = vld [vmem:[#allocation10 + $0x78] sm:$0xff]
    %v406 = vld [vmem:[#allocation10 + $0x80] sm:$0xff]
    %v407 = vld [vmem:[#allocation10 + $0x88] sm:$0xff]
    %v408 = vld [vmem:[#allocation10 + $0x90] sm:$0xff]
    %v409 = vld [vmem:[#allocation10 + $0x98] sm:$0xff]
    %v410 = vld [vmem:[#allocation10 + $0xa0] sm:$0xff]
    %v411 = vld [vmem:[#allocation10 + $0xa8] sm:$0xff]
    %v412 = vld [vmem:[#allocation10 + $0xb0] sm:$0xff]
    %v413 = vld [vmem:[#allocation10 + $0xb8] sm:$0xff]
    %v414 = vld [vmem:[#allocation10 + $0xc0] sm:$0xff]
    %v415 = vld [vmem:[#allocation10 + $0xc8] sm:$0xff]
    %v416 = vld [vmem:[#allocation10 + $0xd0] sm:$0xff]
    %v417 = vld [vmem:[#allocation10 + $0xd8] sm:$0xff]
    %v418 = vld [vmem:[#allocation10 + $0xe0] sm:$0xff]
    %v419 = vld [vmem:[#allocation10 + $0xe8] sm:$0xff]
    %v420 = vld [vmem:[#allocation10 + $0xf0] sm:$0xff]
    %v421 = vld [vmem:[#allocation10 + $0xf8] sm:$0xff]
    %v422 = vld [vmem:[#allocation10 + $0x100] sm:$0xff]
    %v423 = vld [vmem:[#allocation10 + $0x108] sm:$0xff]
    %v424 = vld [vmem:[#allocation10 + $0x110] sm:$0xff]
    %v425 = vld [vmem:[#allocation10 + $0x118] sm:$0xff]
    %v426 = vld [vmem:[#allocation10 + $0x120] sm:$0xff]
    %v427 = vld [vmem:[#allocation10 + $0x128] sm:$0xff]
    %v428 = vld [vmem:[#allocation10 + $0x130] sm:$0xff]
    %v429 = vld [vmem:[#allocation10 + $0x138] sm:$0xff]
    %v430 = vld [vmem:[#allocation10 + $0x140] sm:$0xff]
    %v431 = vld [vmem:[#allocation10 + $0x148] sm:$0xff]
    %v432 = vld [vmem:[#allocation10 + $0x150] sm:$0xff]
    %v433 = vld [vmem:[#allocation10 + $0x158] sm:$0xff]
    %v434 = vld [vmem:[#allocation10 + $0x160] sm:$0xff]
    %v435 = vld [vmem:[#allocation10 + $0x168] sm:$0xff]
    %v436 = vld [vmem:[#allocation10 + $0x170] sm:$0xff]
    %v437 = vld [vmem:[#allocation10 + $0x178] sm:$0xff]
    %v438 = vld [vmem:[#allocation10 + $0x180] sm:$0xff]
    %v439 = vld [vmem:[#allocation10 + $0x188] sm:$0xff]
    %v440 = vld [vmem:[#allocation10 + $0x190] sm:$0xff]
    %v441 = vld [vmem:[#allocation10 + $0x198] sm:$0xff]
    %v442 = vld [vmem:[#allocation10 + $0x1a0] sm:$0xff]
    %v443 = vld [vmem:[#allocation10 + $0x1a8] sm:$0xff]
    %v444 = vld [vmem:[#allocation10 + $0x1b0] sm:$0xff]
    %v445 = vld [vmem:[#allocation10 + $0x1b8] sm:$0xff]
    %v446 = vld [vmem:[#allocation10 + $0x1c0] sm:$0xff]
    %v447 = vld [vmem:[#allocation10 + $0x1c8] sm:$0xff]
    %v448 = vld [vmem:[#allocation10 + $0x1d0] sm:$0xff]
    %v449 = vld [vmem:[#allocation10 + $0x1d8] sm:$0xff]
    %v450 = vld [vmem:[#allocation10 + $0x1e0] sm:$0xff]
    %v451 = vld [vmem:[#allocation10 + $0x1e8] sm:$0xff]
    %v452 = vld [vmem:[#allocation10 + $0x1f0] sm:$0xff]
    %v453 = vld [vmem:[#allocation10 + $0x1f8] sm:$0xff]
    %v454 = vld [vmem:[#allocation10 + $0x200] sm:$0xff]
    %v455 = vld [vmem:[#allocation10 + $0x208] sm:$0xff]
    %vm456 = vcmask 130048
    %v458 = vsel %vm456, %v389, 0
    %460 = vmatpush.msra.mxu0 %v405
    %461 = vmatpush.msra.mxu0 %v404
    %462 = vmatpush.msra.mxu0 %v403
    %463 = vmatpush.msra.mxu0 %v402
    %464 = vmatpush.msra.mxu0 %v401
    %465 = vmatpush.msra.mxu0 %v400
    %466 = vmatpush.msra.mxu0 %v399
    %467 = vmatpush.msra.mxu0 %v398
    %468 = vmatpush.msra.mxu0 %v397
    %469 = vmatpush.msra.mxu0 %v396
    %470 = vmatpush.msra.mxu0 %v395
    %471 = vmatpush.msra.mxu0 %v394
    %472 = vmatpush.msra.mxu0 %v393
    %473 = vmatpush.msra.mxu0 %v392
    %474 = vmatpush.msra.mxu0 %v391
    %475 = vmatpush.msra.mxu0 %v390
    %476 = vmatmul.f32.gmra.mxu0 %v385
    %v477 = vpop.f32.mrf.mxu0
    %v478 = vadd.f32 0.0, %v477
    %479 = vdwg.mxu0
    %480 = vmatpush.msra.mxu0 %v421
    %481 = vmatpush.msra.mxu0 %v420
    %482 = vmatpush.msra.mxu0 %v419
    %483 = vmatpush.msra.mxu0 %v418
    %484 = vmatpush.msra.mxu0 %v417
    %485 = vmatpush.msra.mxu0 %v416
    %486 = vmatpush.msra.mxu0 %v415
    %487 = vmatpush.msra.mxu0 %v414
    %488 = vmatpush.msra.mxu0 %v413
    %489 = vmatpush.msra.mxu0 %v412
    %490 = vmatpush.msra.mxu0 %v411
    %491 = vmatpush.msra.mxu0 %v410
    %492 = vmatpush.msra.mxu0 %v409
    %493 = vmatpush.msra.mxu0 %v408
    %494 = vmatpush.msra.mxu0 %v407
    %495 = vmatpush.msra.mxu0 %v406
    %496 = vmatmul.f32.gmra.mxu0 %v386
    %v497 = vpop.f32.mrf.mxu0
    %v498 = vadd.f32 %v478, %v497
    %499 = vdwg.mxu0
    %500 = vmatpush.msra.mxu0 %v437
    %501 = vmatpush.msra.mxu0 %v436
    %502 = vmatpush.msra.mxu0 %v435
    %503 = vmatpush.msra.mxu0 %v434
    %504 = vmatpush.msra.mxu0 %v433
    %505 = vmatpush.msra.mxu0 %v432
    %506 = vmatpush.msra.mxu0 %v431
    %507 = vmatpush.msra.mxu0 %v430
    %508 = vmatpush.msra.mxu0 %v429
    %509 = vmatpush.msra.mxu0 %v428
    %510 = vmatpush.msra.mxu0 %v427
    %511 = vmatpush.msra.mxu0 %v426
    %512 = vmatpush.msra.mxu0 %v425
    %513 = vmatpush.msra.mxu0 %v424
    %514 = vmatpush.msra.mxu0 %v423
    %515 = vmatpush.msra.mxu0 %v422
    %516 = vmatmul.f32.gmra.mxu0 %v387
    %v517 = vpop.f32.mrf.mxu0
    %v518 = vadd.f32 %v498, %v517
    %519 = vdwg.mxu0
    %520 = vmatpush.msra.mxu0 %v453
    %521 = vmatpush.msra.mxu0 %v452
    %522 = vmatpush.msra.mxu0 %v451
    %523 = vmatpush.msra.mxu0 %v450
    %524 = vmatpush.msra.mxu0 %v449
    %525 = vmatpush.msra.mxu0 %v448
    %526 = vmatpush.msra.mxu0 %v447
    %527 = vmatpush.msra.mxu0 %v446
    %528 = vmatpush.msra.mxu0 %v445
    %529 = vmatpush.msra.mxu0 %v444
    %530 = vmatpush.msra.mxu0 %v443
    %531 = vmatpush.msra.mxu0 %v442
    %532 = vmatpush.msra.mxu0 %v441
    %533 = vmatpush.msra.mxu0 %v440
    %534 = vmatpush.msra.mxu0 %v439
    %535 = vmatpush.msra.mxu0 %v438
    %536 = vmatmul.f32.gmra.mxu0 %v388
    %v537 = vpop.f32.mrf.mxu0
    %v538 = vadd.f32 %v518, %v537
    %539 = vdwg.mxu0
    %540 = vmatpush.msra.mxu0 0.0
    %541 = vmatpush.msra.mxu0 0.0
    %542 = vmatpush.msra.mxu0 0.0
    %543 = vmatpush.msra.mxu0 0.0
    %544 = vmatpush.msra.mxu0 0.0
    %545 = vmatpush.msra.mxu0 0.0
    %546 = vmatpush.msra.mxu0 0.0
    %547 = vmatpush.msra.mxu0 0.0
    %548 = vmatpush.msra.mxu0 0.0
    %549 = vmatpush.msra.mxu0 0.0
    %550 = vmatpush.msra.mxu0 0.0
    %551 = vmatpush.msra.mxu0 0.0
    %552 = vmatpush.msra.mxu0 0.0
    %553 = vmatpush.msra.mxu0 0.0
    %554 = vmatpush.msra.mxu0 %v455
    %555 = vmatpush.msra.mxu0 %v454
    %556 = vmatmul.f32.gmra.mxu0 %v458
    %v557 = vpop.f32.mrf.mxu0
    %v558 = vadd.f32 %v538, %v557
    %559 = vdwg.mxu0
    %560 = vst [vmem:[#allocation11] sm:$0xff] %v558
    // Predicated region
    $region42: #{tpu_custom_call.1} parent=1 // pred_check
      _
    $region43: #{tpu_custom_call.1} parent=1 // pred_check_branch
      %562 = sbr.rel (0) target = $region45
    $region44: #{tpu_custom_call.1} parent=1 // pred_region
      %564 = vsyncadd [#allocation4], 0
      %s566 = sshll.u32 [#allocation11], 4
      %s567 = int_to_ptr.vmem [resolvable:$true] %s566
      %s568 = sshll.u32 %s5, 4
      %s569 = int_to_ptr.hbm [resolvable:$true] %s568
      %571 = dma.vmem_to_hbm [thread:$0]  %s567, 128, %s569, [#allocation4]
    $region45: #{tpu_custom_call.1} parent=1 // pred_fallthru
      _
    // Predicated region
    $region46: #{tpu_custom_call.1} parent=1 // pred_check
      _
    $region47: #{tpu_custom_call.1} parent=1 // pred_check_branch
      %573 = sbr.rel (0) target = $region49
    $region48: #{tpu_custom_call.1} parent=1 // pred_region
      %575 = dma.done [#allocation4], 128
    $region49: #{tpu_custom_call.1} parent=1 // pred_fallthru
      _
    %576 = vsyncpa [#allocation3], 1
    %577 = vsyncpa [#allocation6], 1
    %578 = vsyncpa [#allocation9], 1
    %579 = vsyncpa [#allocation4], 1

</llo_original>
